<compile_context>
chip_gen: v7x
topology: tpu7x:2x2x1
jax: 0.10.0
libtpu: 0.0.40
codegen_flags: <defaults>
</compile_context>

<pallas_src>
import functools

import jax
import jax.numpy as jnp
from jax.experimental import pallas as pl
from jax.experimental.pallas import tpu as pltpu

_EPS = 1e-5          # nn.InstanceNorm3d default eps
_NEG_SLOPE = 0.1     # nn.LeakyReLU(negative_slope=0.1)


def _round_up(v, m):
    return (v + m - 1) // m * m


def _vgg_block_kernel(x_ref, w1_ref, w2_ref, mask_ref, o_ref, *, deltas, s_size):
    # x_ref:    (1, Cin_p,  S)   one sample, channels on sublanes, spatial on lanes
    # w1_ref:   (Cmid_p, 8*Cin_p)   fused tap weights, stage 1
    # w2_ref:   (Cout_p, 8*Cmid_p)  fused tap weights, stage 2
    # mask_ref: (8, S)              per-tap zero-padding validity masks (0/1 f32)
    # o_ref:    (1, Cout_p, S)
    masks = mask_ref[...]
    inv_s = 1.0 / float(s_size)

    def taps_of(a):
        # a: (C, S) -> (8*C, S); tap t = kd*4 + kh*2 + kw reads x[s + delta_t]
        # (zero outside the volume, matching Conv3d pad=1, dilation=2).
        pieces = []
        for t, delta in enumerate(deltas):
            shifted = pltpu.roll(a, (-delta) % s_size, axis=1)   # x[:, s + delta]
            pieces.append(shifted * masks[t:t + 1, :])
        return jnp.concatenate(pieces, axis=0)

    def stage(a, w_fused):
        # Dilated 2x2x2 conv as ONE MXU dot: (Co, 8*Ci) @ (8*Ci, S) -> (Co, S)
        y = jnp.dot(w_fused, taps_of(a), preferred_element_type=jnp.float32)
        # InstanceNorm3d(affine=False): per-channel over spatial, single pass.
        mean = jnp.sum(y, axis=1, keepdims=True) * inv_s
        ex2 = jnp.sum(y * y, axis=1, keepdims=True) * inv_s
        var = ex2 - mean * mean
        yn = (y - mean) * jax.lax.rsqrt(var + _EPS)
        # LeakyReLU(0.1)
        return jnp.where(yn >= 0, yn, _NEG_SLOPE * yn)

    y1 = stage(x_ref[0], w1_ref[...])           # (Cmid_p, S) — stays on-chip
    o_ref[0] = stage(y1, w2_ref[...]).astype(o_ref.dtype)


def _fuse_weight(w, cin_p, cout_p):
    # PyTorch (Cout, Cin, 2, 2, 2) -> (Cout_p, 8*Cin_p); column = t*Cin_p + ci,
    # tap t = kd*4 + kh*2 + kw; padded rows/columns are zero.
    cout, cin = w.shape[:2]
    wt = jnp.transpose(w.reshape(cout, cin, 8), (0, 2, 1))        # (Cout, 8, Cin)
    wt = jnp.pad(wt, ((0, cout_p - cout), (0, 0), (0, cin_p - cin)))
    return wt.reshape(cout_p, 8 * cin_p)


def _tap_masks_and_deltas(d, h, w):
    # For tap (kd, kh, kw), the conv reads unpadded offset (2k-1) in each dim.
    dd = jnp.arange(d)
    hh = jnp.arange(h)
    ww = jnp.arange(w)
    masks, deltas = [], []
    for kd in (0, 1):
        for kh in (0, 1):
            for kw in (0, 1):
                od, oh, ow = 2 * kd - 1, 2 * kh - 1, 2 * kw - 1
                deltas.append(od * h * w + oh * w + ow)
                md = (dd + od >= 0) & (dd + od < d)
                mh = (hh + oh >= 0) & (hh + oh < h)
                mw = (ww + ow >= 0) & (ww + ow < w)
                m = md[:, None, None] & mh[None, :, None] & mw[None, None, :]
                masks.append(m.reshape(-1))
    return jnp.stack(masks, 0).astype(jnp.float32), tuple(deltas)


def vgg_block_3d(x, w1, b1, w2, b2):
    # x: (N, Cin, D, H, W) f32 -> (N, Cout, D, H, W) f32.
    # b1/b2 accepted for API parity but unused: a per-channel bias added right
    # before InstanceNorm(affine=False) cancels exactly when the mean is removed.
    del b1, b2
    n, cin, d, h, w = x.shape
    s = d * h * w
    cmid, cout = w1.shape[0], w2.shape[0]
    cin_p, cmid_p, cout_p = (_round_up(c, 8) for c in (cin, cmid, cout))

    x_flat = jnp.pad(x.reshape(n, cin, s), ((0, 0), (0, cin_p - cin), (0, 0)))
    w1f = _fuse_weight(w1, cin_p, cmid_p)       # (Cmid_p, 8*Cin_p)
    w2f = _fuse_weight(w2, cmid_p, cout_p)      # (Cout_p, 8*Cmid_p)
    masks, deltas = _tap_masks_and_deltas(d, h, w)

    kernel = functools.partial(_vgg_block_kernel, deltas=deltas, s_size=s)
    flops = 2 * n * s * 8 * (cin_p * cmid_p + cmid_p * cout_p)
    bytes_acc = 4 * (x_flat.size + w1f.size + w2f.size + masks.size + n * cout_p * s)

    y = pl.pallas_call(
        kernel,
        out_shape=jax.ShapeDtypeStruct((n, cout_p, s), jnp.float32),
        grid=(n,),
        in_specs=[
            pl.BlockSpec((1, cin_p, s), lambda i: (i, 0, 0)),
            pl.BlockSpec((cmid_p, 8 * cin_p), lambda i: (0, 0)),
            pl.BlockSpec((cout_p, 8 * cmid_p), lambda i: (0, 0)),
            pl.BlockSpec((8, s), lambda i: (0, 0)),
        ],
        out_specs=pl.BlockSpec((1, cout_p, s), lambda i: (i, 0, 0)),
        compiler_params=pltpu.CompilerParams(
            dimension_semantics=("parallel",)),
        cost_estimate=pl.CostEstimate(
            flops=flops,
            transcendentals=n * (cmid_p + cout_p),
            bytes_accessed=bytes_acc),
    )(x_flat, w1f, w2f, masks)

    return y[:, :cout, :].reshape(n, cout, d, h, w)


def _reference(x, w1, b1, w2, b2):
    # Pure-JAX reference matching the PyTorch module semantics (bias included).
    def conv(t, wgt, bias):
        y = jax.lax.conv_general_dilated(
            t, wgt, window_strides=(1, 1, 1),
            padding=((1, 1), (1, 1), (1, 1)),
            rhs_dilation=(2, 2, 2),
            dimension_numbers=('NCDHW', 'OIDHW', 'NCDHW'))
        return y + bias[None, :, None, None, None]

    def inorm(t):
        m = t.mean(axis=(2, 3, 4), keepdims=True)
        v = ((t - m) ** 2).mean(axis=(2, 3, 4), keepdims=True)
        return (t - m) * jax.lax.rsqrt(v + _EPS)

    def lrelu(t):
        return jnp.where(t >= 0, t, _NEG_SLOPE * t)

    hmid = lrelu(inorm(conv(x, w1, b1)))
    return lrelu(inorm(conv(hmid, w2, b2)))


if __name__ == "__main__":
    key = jax.random.PRNGKey(0)
    kx, kw1, kb1, kw2, kb2 = jax.random.split(key, 5)

    N, Cin, Cmid, Cout = 2, 4, 8, 8
    D = H = W = 8

    fan1 = float(Cin * 2 * 2 * 2)
    fan2 = float(Cmid * 2 * 2 * 2)
    w1 = jax.random.uniform(kw1, (Cmid, Cin, 2, 2, 2), jnp.float32, -1.0, 1.0) / jnp.sqrt(fan1)
    b1 = jax.random.uniform(kb1, (Cmid,), jnp.float32, -1.0, 1.0) / jnp.sqrt(fan1)
    w2 = jax.random.uniform(kw2, (Cout, Cmid, 2, 2, 2), jnp.float32, -1.0, 1.0) / jnp.sqrt(fan2)
    b2 = jax.random.uniform(kb2, (Cout,), jnp.float32, -1.0, 1.0) / jnp.sqrt(fan2)
    x = jax.random.normal(kx, (N, Cin, D, H, W), jnp.float32)

    out = jax.jit(vgg_block_3d)(x, w1, b1, w2, b2)
    out = jax.block_until_ready(out)
    assert out.shape == (N, Cout, D, H, W), out.shape

    ref = _reference(x, w1, b1, w2, b2)
    err = float(jnp.max(jnp.abs(out - ref)))
    assert err < 1e-2, f"max abs err vs reference: {err}"

    print("KERNEL_OK")
</pallas_src>

<mosaic_0001>
module attributes {stable_mosaic.version = 11 : i64} {
  func.func @_vgg_block_kernel(%arg0: i32, %arg1: memref<1x8x512xf32, #tpu.memory_space<vmem>>, %arg2: memref<8x64xf32, #tpu.memory_space<vmem>>, %arg3: memref<8x64xf32, #tpu.memory_space<vmem>>, %arg4: memref<8x512xf32, #tpu.memory_space<vmem>>, %arg5: memref<1x8x512xf32, #tpu.memory_space<vmem>>) attributes {dimension_semantics = [#tpu.dimension_semantics<parallel>], iteration_bounds = array<i64: 2>, scalar_prefetch = 0 : i64, scratch_operands = 0 : i64, tpu.core_type = #tpu.core_type<tc>, window_params = [{transform_indices = @transform_0, window_bounds = array<i64: 1, 8, 512>}, {pipeline_mode = #tpu.pipeline_mode<synchronous>, transform_indices = @transform_1, window_bounds = array<i64: 8, 64>}, {pipeline_mode = #tpu.pipeline_mode<synchronous>, transform_indices = @transform_2, window_bounds = array<i64: 8, 64>}, {pipeline_mode = #tpu.pipeline_mode<synchronous>, transform_indices = @transform_3, window_bounds = array<i64: 8, 512>}, {transform_indices = @transform_4, window_bounds = array<i64: 1, 8, 512>}]} {
    %c0 = arith.constant 0 : index
    %c0_0 = arith.constant 0 : index
    %0 = vector.load %arg4[%c0, %c0_0] : memref<8x512xf32, #tpu.memory_space<vmem>>, vector<8x512xf32>
    %c0_1 = arith.constant 0 : index
    %c0_2 = arith.constant 0 : index
    %c0_3 = arith.constant 0 : index
    %1 = vector.load %arg1[%c0_1, %c0_2, %c0_3] : memref<1x8x512xf32, #tpu.memory_space<vmem>>, vector<1x8x512xf32>
    %2 = vector.shape_cast %1 : vector<1x8x512xf32> to vector<8x512xf32>
    %c0_4 = arith.constant 0 : index
    %c0_5 = arith.constant 0 : index
    %3 = vector.load %arg2[%c0_4, %c0_5] : memref<8x64xf32, #tpu.memory_space<vmem>>, vector<8x64xf32>
    %c73_i32 = arith.constant 73 : i32
    %4 = tpu.dynamic_rotate %2 by %c73_i32 dim 1 : vector<8x512xf32>, i32 -> vector<8x512xf32>
    %5 = vector.extract_strided_slice %0 {offsets = [0, 0], sizes = [1, 512], strides = [1, 1]} : vector<8x512xf32> to vector<1x512xf32>
    %6 = vector.broadcast %5 : vector<1x512xf32> to vector<8x512xf32>
    %7 = arith.mulf %4, %6 : vector<8x512xf32>
    %c71_i32 = arith.constant 71 : i32
    %8 = tpu.dynamic_rotate %2 by %c71_i32 dim 1 : vector<8x512xf32>, i32 -> vector<8x512xf32>
    %9 = vector.extract_strided_slice %0 {offsets = [1, 0], sizes = [1, 512], strides = [1, 1]} : vector<8x512xf32> to vector<1x512xf32>
    %10 = vector.broadcast %9 : vector<1x512xf32> to vector<8x512xf32>
    %11 = arith.mulf %8, %10 : vector<8x512xf32>
    %c57_i32 = arith.constant 57 : i32
    %12 = tpu.dynamic_rotate %2 by %c57_i32 dim 1 : vector<8x512xf32>, i32 -> vector<8x512xf32>
    %13 = vector.extract_strided_slice %0 {offsets = [2, 0], sizes = [1, 512], strides = [1, 1]} : vector<8x512xf32> to vector<1x512xf32>
    %14 = vector.broadcast %13 : vector<1x512xf32> to vector<8x512xf32>
    %15 = arith.mulf %12, %14 : vector<8x512xf32>
    %c55_i32 = arith.constant 55 : i32
    %16 = tpu.dynamic_rotate %2 by %c55_i32 dim 1 : vector<8x512xf32>, i32 -> vector<8x512xf32>
    %17 = vector.extract_strided_slice %0 {offsets = [3, 0], sizes = [1, 512], strides = [1, 1]} : vector<8x512xf32> to vector<1x512xf32>
    %18 = vector.broadcast %17 : vector<1x512xf32> to vector<8x512xf32>
    %19 = arith.mulf %16, %18 : vector<8x512xf32>
    %c457_i32 = arith.constant 457 : i32
    %20 = tpu.dynamic_rotate %2 by %c457_i32 dim 1 : vector<8x512xf32>, i32 -> vector<8x512xf32>
    %21 = vector.extract_strided_slice %0 {offsets = [4, 0], sizes = [1, 512], strides = [1, 1]} : vector<8x512xf32> to vector<1x512xf32>
    %22 = vector.broadcast %21 : vector<1x512xf32> to vector<8x512xf32>
    %23 = arith.mulf %20, %22 : vector<8x512xf32>
    %c455_i32 = arith.constant 455 : i32
    %24 = tpu.dynamic_rotate %2 by %c455_i32 dim 1 : vector<8x512xf32>, i32 -> vector<8x512xf32>
    %25 = vector.extract_strided_slice %0 {offsets = [5, 0], sizes = [1, 512], strides = [1, 1]} : vector<8x512xf32> to vector<1x512xf32>
    %26 = vector.broadcast %25 : vector<1x512xf32> to vector<8x512xf32>
    %27 = arith.mulf %24, %26 : vector<8x512xf32>
    %c441_i32 = arith.constant 441 : i32
    %28 = tpu.dynamic_rotate %2 by %c441_i32 dim 1 : vector<8x512xf32>, i32 -> vector<8x512xf32>
    %29 = vector.extract_strided_slice %0 {offsets = [6, 0], sizes = [1, 512], strides = [1, 1]} : vector<8x512xf32> to vector<1x512xf32>
    %30 = vector.broadcast %29 : vector<1x512xf32> to vector<8x512xf32>
    %31 = arith.mulf %28, %30 : vector<8x512xf32>
    %c439_i32 = arith.constant 439 : i32
    %32 = tpu.dynamic_rotate %2 by %c439_i32 dim 1 : vector<8x512xf32>, i32 -> vector<8x512xf32>
    %33 = vector.extract_strided_slice %0 {offsets = [7, 0], sizes = [1, 512], strides = [1, 1]} : vector<8x512xf32> to vector<1x512xf32>
    %34 = vector.broadcast %33 : vector<1x512xf32> to vector<8x512xf32>
    %35 = arith.mulf %32, %34 : vector<8x512xf32>
    %36 = tpu.concatenate %7, %11, %15, %19, %23, %27, %31, %35 in 0 : vector<8x512xf32>, vector<8x512xf32>, vector<8x512xf32>, vector<8x512xf32>, vector<8x512xf32>, vector<8x512xf32>, vector<8x512xf32>, vector<8x512xf32> -> vector<64x512xf32>
    %cst = arith.constant dense<0.000000e+00> : vector<8x512xf32>
    %37 = tpu.matmul %3, %36, %cst {dimension_numbers = #tpu.dot_dimension_numbers<[1], [0], [0], [1], [0, 0, 1, 1], [], []>} : vector<8x64xf32>, vector<64x512xf32>, vector<8x512xf32> -> vector<8x512xf32>
    %cst_6 = arith.constant dense<0.000000e+00> : vector<8xf32>
    %38 = vector.multi_reduction <add>, %37, %cst_6 [1] : vector<8x512xf32> to vector<8xf32>
    %39 = vector.shape_cast %38 : vector<8xf32> to vector<8x1xf32>
    %cst_7 = arith.constant 0.001953125 : f32
    %40 = vector.broadcast %cst_7 : f32 to vector<8x1xf32>
    %41 = arith.mulf %39, %40 : vector<8x1xf32>
    %42 = arith.mulf %37, %37 : vector<8x512xf32>
    %cst_8 = arith.constant dense<0.000000e+00> : vector<8xf32>
    %43 = vector.multi_reduction <add>, %42, %cst_8 [1] : vector<8x512xf32> to vector<8xf32>
    %44 = vector.shape_cast %43 : vector<8xf32> to vector<8x1xf32>
    %cst_9 = arith.constant 0.001953125 : f32
    %45 = vector.broadcast %cst_9 : f32 to vector<8x1xf32>
    %46 = arith.mulf %44, %45 : vector<8x1xf32>
    %47 = arith.mulf %41, %41 : vector<8x1xf32>
    %48 = arith.subf %46, %47 : vector<8x1xf32>
    %49 = vector.broadcast %41 : vector<8x1xf32> to vector<8x512xf32>
    %50 = arith.subf %37, %49 : vector<8x512xf32>
    %cst_10 = arith.constant 9.99999974E-6 : f32
    %51 = vector.broadcast %cst_10 : f32 to vector<8x1xf32>
    %52 = arith.addf %48, %51 : vector<8x1xf32>
    %53 = math.rsqrt %52 : vector<8x1xf32>
    %54 = vector.broadcast %53 : vector<8x1xf32> to vector<8x512xf32>
    %55 = arith.mulf %50, %54 : vector<8x512xf32>
    %cst_11 = arith.constant 0.000000e+00 : f32
    %56 = vector.broadcast %cst_11 : f32 to vector<8x512xf32>
    %57 = arith.cmpf oge, %55, %56 : vector<8x512xf32>
    %cst_12 = arith.constant 1.000000e-01 : f32
    %58 = vector.broadcast %cst_12 : f32 to vector<8x512xf32>
    %59 = arith.mulf %58, %55 : vector<8x512xf32>
    %60 = arith.select %57, %55, %59 : vector<8x512xi1>, vector<8x512xf32>
    %c0_13 = arith.constant 0 : index
    %c0_14 = arith.constant 0 : index
    %61 = vector.load %arg3[%c0_13, %c0_14] : memref<8x64xf32, #tpu.memory_space<vmem>>, vector<8x64xf32>
    %c73_i32_15 = arith.constant 73 : i32
    %62 = tpu.dynamic_rotate %60 by %c73_i32_15 dim 1 : vector<8x512xf32>, i32 -> vector<8x512xf32>
    %63 = vector.extract_strided_slice %0 {offsets = [0, 0], sizes = [1, 512], strides = [1, 1]} : vector<8x512xf32> to vector<1x512xf32>
    %64 = vector.broadcast %63 : vector<1x512xf32> to vector<8x512xf32>
    %65 = arith.mulf %62, %64 : vector<8x512xf32>
    %c71_i32_16 = arith.constant 71 : i32
    %66 = tpu.dynamic_rotate %60 by %c71_i32_16 dim 1 : vector<8x512xf32>, i32 -> vector<8x512xf32>
    %67 = vector.extract_strided_slice %0 {offsets = [1, 0], sizes = [1, 512], strides = [1, 1]} : vector<8x512xf32> to vector<1x512xf32>
    %68 = vector.broadcast %67 : vector<1x512xf32> to vector<8x512xf32>
    %69 = arith.mulf %66, %68 : vector<8x512xf32>
    %c57_i32_17 = arith.constant 57 : i32
    %70 = tpu.dynamic_rotate %60 by %c57_i32_17 dim 1 : vector<8x512xf32>, i32 -> vector<8x512xf32>
    %71 = vector.extract_strided_slice %0 {offsets = [2, 0], sizes = [1, 512], strides = [1, 1]} : vector<8x512xf32> to vector<1x512xf32>
    %72 = vector.broadcast %71 : vector<1x512xf32> to vector<8x512xf32>
    %73 = arith.mulf %70, %72 : vector<8x512xf32>
    %c55_i32_18 = arith.constant 55 : i32
    %74 = tpu.dynamic_rotate %60 by %c55_i32_18 dim 1 : vector<8x512xf32>, i32 -> vector<8x512xf32>
    %75 = vector.extract_strided_slice %0 {offsets = [3, 0], sizes = [1, 512], strides = [1, 1]} : vector<8x512xf32> to vector<1x512xf32>
    %76 = vector.broadcast %75 : vector<1x512xf32> to vector<8x512xf32>
    %77 = arith.mulf %74, %76 : vector<8x512xf32>
    %c457_i32_19 = arith.constant 457 : i32
    %78 = tpu.dynamic_rotate %60 by %c457_i32_19 dim 1 : vector<8x512xf32>, i32 -> vector<8x512xf32>
    %79 = vector.extract_strided_slice %0 {offsets = [4, 0], sizes = [1, 512], strides = [1, 1]} : vector<8x512xf32> to vector<1x512xf32>
    %80 = vector.broadcast %79 : vector<1x512xf32> to vector<8x512xf32>
    %81 = arith.mulf %78, %80 : vector<8x512xf32>
    %c455_i32_20 = arith.constant 455 : i32
    %82 = tpu.dynamic_rotate %60 by %c455_i32_20 dim 1 : vector<8x512xf32>, i32 -> vector<8x512xf32>
    %83 = vector.extract_strided_slice %0 {offsets = [5, 0], sizes = [1, 512], strides = [1, 1]} : vector<8x512xf32> to vector<1x512xf32>
    %84 = vector.broadcast %83 : vector<1x512xf32> to vector<8x512xf32>
    %85 = arith.mulf %82, %84 : vector<8x512xf32>
    %c441_i32_21 = arith.constant 441 : i32
    %86 = tpu.dynamic_rotate %60 by %c441_i32_21 dim 1 : vector<8x512xf32>, i32 -> vector<8x512xf32>
    %87 = vector.extract_strided_slice %0 {offsets = [6, 0], sizes = [1, 512], strides = [1, 1]} : vector<8x512xf32> to vector<1x512xf32>
    %88 = vector.broadcast %87 : vector<1x512xf32> to vector<8x512xf32>
    %89 = arith.mulf %86, %88 : vector<8x512xf32>
    %c439_i32_22 = arith.constant 439 : i32
    %90 = tpu.dynamic_rotate %60 by %c439_i32_22 dim 1 : vector<8x512xf32>, i32 -> vector<8x512xf32>
    %91 = vector.extract_strided_slice %0 {offsets = [7, 0], sizes = [1, 512], strides = [1, 1]} : vector<8x512xf32> to vector<1x512xf32>
    %92 = vector.broadcast %91 : vector<1x512xf32> to vector<8x512xf32>
    %93 = arith.mulf %90, %92 : vector<8x512xf32>
    %94 = tpu.concatenate %65, %69, %73, %77, %81, %85, %89, %93 in 0 : vector<8x512xf32>, vector<8x512xf32>, vector<8x512xf32>, vector<8x512xf32>, vector<8x512xf32>, vector<8x512xf32>, vector<8x512xf32>, vector<8x512xf32> -> vector<64x512xf32>
    %cst_23 = arith.constant dense<0.000000e+00> : vector<8x512xf32>
    %95 = tpu.matmul %61, %94, %cst_23 {dimension_numbers = #tpu.dot_dimension_numbers<[1], [0], [0], [1], [0, 0, 1, 1], [], []>} : vector<8x64xf32>, vector<64x512xf32>, vector<8x512xf32> -> vector<8x512xf32>
    %cst_24 = arith.constant dense<0.000000e+00> : vector<8xf32>
    %96 = vector.multi_reduction <add>, %95, %cst_24 [1] : vector<8x512xf32> to vector<8xf32>
    %97 = vector.shape_cast %96 : vector<8xf32> to vector<8x1xf32>
    %cst_25 = arith.constant 0.001953125 : f32
    %98 = vector.broadcast %cst_25 : f32 to vector<8x1xf32>
    %99 = arith.mulf %97, %98 : vector<8x1xf32>
    %100 = arith.mulf %95, %95 : vector<8x512xf32>
    %cst_26 = arith.constant dense<0.000000e+00> : vector<8xf32>
    %101 = vector.multi_reduction <add>, %100, %cst_26 [1] : vector<8x512xf32> to vector<8xf32>
    %102 = vector.shape_cast %101 : vector<8xf32> to vector<8x1xf32>
    %cst_27 = arith.constant 0.001953125 : f32
    %103 = vector.broadcast %cst_27 : f32 to vector<8x1xf32>
    %104 = arith.mulf %102, %103 : vector<8x1xf32>
    %105 = arith.mulf %99, %99 : vector<8x1xf32>
    %106 = arith.subf %104, %105 : vector<8x1xf32>
    %107 = vector.broadcast %99 : vector<8x1xf32> to vector<8x512xf32>
    %108 = arith.subf %95, %107 : vector<8x512xf32>
    %cst_28 = arith.constant 9.99999974E-6 : f32
    %109 = vector.broadcast %cst_28 : f32 to vector<8x1xf32>
    %110 = arith.addf %106, %109 : vector<8x1xf32>
    %111 = math.rsqrt %110 : vector<8x1xf32>
    %112 = vector.broadcast %111 : vector<8x1xf32> to vector<8x512xf32>
    %113 = arith.mulf %108, %112 : vector<8x512xf32>
    %cst_29 = arith.constant 0.000000e+00 : f32
    %114 = vector.broadcast %cst_29 : f32 to vector<8x512xf32>
    %115 = arith.cmpf oge, %113, %114 : vector<8x512xf32>
    %cst_30 = arith.constant 1.000000e-01 : f32
    %116 = vector.broadcast %cst_30 : f32 to vector<8x512xf32>
    %117 = arith.mulf %116, %113 : vector<8x512xf32>
    %118 = arith.select %115, %113, %117 : vector<8x512xi1>, vector<8x512xf32>
    %c0_31 = arith.constant 0 : index
    %c0_32 = arith.constant 0 : index
    %c0_33 = arith.constant 0 : index
    %119 = vector.load %arg5[%c0_31, %c0_32, %c0_33] : memref<1x8x512xf32, #tpu.memory_space<vmem>>, vector<1x8x512xf32>
    %120 = vector.shape_cast %119 : vector<1x8x512xf32> to vector<8x512xf32>
    %121 = vector.shape_cast %118 : vector<8x512xf32> to vector<1x8x512xf32>
    tpu.vector_store %arg5[%c0_31, %c0_32, %c0_33], %121 {strides = array<i32>} : memref<1x8x512xf32, #tpu.memory_space<vmem>>, vector<1x8x512xf32>,
    return
  }
  func.func @transform_0(%arg0: i32) -> (i32, i32, i32) {
    %c0_i32 = arith.constant 0 : i32
    %c0_i32_0 = arith.constant 0 : i32
    %c0_i32_1 = arith.constant 0 : i32
    return %arg0, %c0_i32, %c0_i32_0 : i32, i32, i32
  }
  func.func @transform_1(%arg0: i32) -> (i32, i32) {
    %c0_i32 = arith.constant 0 : i32
    %c0_i32_0 = arith.constant 0 : i32
    %c0_i32_1 = arith.constant 0 : i32
    return %c0_i32, %c0_i32_0 : i32, i32
  }
  func.func @transform_2(%arg0: i32) -> (i32, i32) {
    %c0_i32 = arith.constant 0 : i32
    %c0_i32_0 = arith.constant 0 : i32
    %c0_i32_1 = arith.constant 0 : i32
    return %c0_i32, %c0_i32_0 : i32, i32
  }
  func.func @transform_3(%arg0: i32) -> (i32, i32) {
    %c0_i32 = arith.constant 0 : i32
    %c0_i32_0 = arith.constant 0 : i32
    %c0_i32_1 = arith.constant 0 : i32
    return %c0_i32, %c0_i32_0 : i32, i32
  }
  func.func @transform_4(%arg0: i32) -> (i32, i32, i32) {
    %c0_i32 = arith.constant 0 : i32
    %c0_i32_0 = arith.constant 0 : i32
    %c0_i32_1 = arith.constant 0 : i32
    return %arg0, %c0_i32, %c0_i32_0 : i32, i32, i32
  }
}

</mosaic_0001>

<llo_original>
// kernel: vgg_block_3d.1
$region0: #{vgg_block_3d.1}
  #allocation0 [shape = 'u32[]', space=smem, size = 0x4, offset = 0x4, fixed_abs, tag = 'smem constant byte address 0x4 - core index']
  #allocation1 [shape = 'u32[144,128]{1,0:T(1,128)}', space=vmem, size = 0x12000, scoped, tag = 'internal scratch']
  %s0 = inlined_call_operand.vmem [shape: f32[2,8,512], index: 0, kind: input, shape index: {}]
  %s1 = inlined_call_operand.vmem [shape: f32[8,64], index: 1, kind: input, shape index: {}]
  %s2 = inlined_call_operand.vmem [shape: f32[8,64], index: 2, kind: input, shape index: {}]
  %s3 = inlined_call_operand.vmem [shape: f32[8,512], index: 3, kind: input, shape index: {}]
  %s4 = inlined_call_operand.vmem [shape: f32[2,8,512], index: 4, kind: output, shape index: {}]
  %s5 = sld [smem:[#allocation0]]
  $region49: #{vgg_block_3d.1} parent=0
    _
  %s7 = ssub.s32 1, %s5
  %s8 = scalar_select 0, %s7, %s5
  loop: start=0, step=1, limit=4
  $region2: #{vgg_block_3d.1} parent=0 // loop_pre_header
    _
  $region3: #{vgg_block_3d.1} parent=0 // loop_header
    %s10 = sphi 0, %s14
    %p11 = scmp.ge.s32.totalorder %s10, 4
    %s20 = sphi 0, %s22
    %s23 = sphi 0, %s20
    %s24 = sphi 0, %s23
    %s40 = sphi 0, %s24
    %s44 = sphi 0, %s44
    %s46 = sphi 0, %s44
    %s47 = sphi 0, %s46
    %s61 = sphi 0, %s47
    %s65 = sphi 0, %s65
    %s67 = sphi 0, %s65
    %s68 = sphi 0, %s67
    %s82 = sphi 0, %s68
    %s86 = sphi 0, %s86
    %s88 = sphi 0, %s86
    %s89 = sphi 0, %s88
    %s103 = sphi 0, %s89
    %s109 = sphi 0, %s111
    %s112 = sphi 0, %s109
    %s113 = sphi 0, %s112
    %s129 = sphi 0, %s113
  $region4: #{vgg_block_3d.1} parent=0 // loop_header_branch
    %13 = sbr.rel (%p11) target = $region8
  $region5: #{vgg_block_3d.1} parent=0 // loop_body
    %s15 = ssub.s32 %s10, 1
    %s16 = ssub.s32 %s10, 2
    %s17 = sadd.s32 %s10, 1
    %s18 = ssub.s32 %s10, %s17
    %p19 = scmp.eq.s32.totalorder %s18, 0
    %s21 = sadd.s32 %s20, 1
    %s22 = scalar_select %p19, %s20, %s21
    %p25 = pneg %p19
    %p26 = scmp.eq.s32.totalorder %s10, 1
    %p27 = por %p25, %p26
    %p28 = scmp.ne.s32.totalorder %s20, %s23
    %p29 = scmp.eq.s32.totalorder %s10, 0
    %p30 = por %p28, %p29
    %p31 = scmp.ne.s32.totalorder %s20, %s23
    %p32 = scmp.eq.s32.totalorder %s15, 1
    %p33 = por %p31, %p32
    %p34 = scmp.ne.s32.totalorder %s23, %s24
    %p35 = scmp.eq.s32.totalorder %s15, 0
    %p36 = por %p34, %p35
    %p37 = scmp.ne.s32.totalorder %s23, %s24
    %p38 = scmp.eq.s32.totalorder %s16, 1
    %p39 = por %p37, %p38
    %p41 = scmp.ne.s32.totalorder %s24, %s40
    %p42 = scmp.eq.s32.totalorder %s16, 0
    %p43 = por %p41, %p42
    %s45 = sadd.s32 %s44, 1
    %p48 = scmp.eq.s32.totalorder %s10, 1
    %p49 = scmp.ne.s32.totalorder %s44, %s46
    %p50 = scmp.eq.s32.totalorder %s10, 0
    %p51 = por %p49, %p50
    %p52 = scmp.ne.s32.totalorder %s44, %s46
    %p53 = scmp.eq.s32.totalorder %s15, 1
    %p54 = por %p52, %p53
    %p55 = scmp.ne.s32.totalorder %s46, %s47
    %p56 = scmp.eq.s32.totalorder %s15, 0
    %p57 = por %p55, %p56
    %p58 = scmp.ne.s32.totalorder %s46, %s47
    %p59 = scmp.eq.s32.totalorder %s16, 1
    %p60 = por %p58, %p59
    %p62 = scmp.ne.s32.totalorder %s47, %s61
    %p63 = scmp.eq.s32.totalorder %s16, 0
    %p64 = por %p62, %p63
    %s66 = sadd.s32 %s65, 1
    %p69 = scmp.eq.s32.totalorder %s10, 1
    %p70 = scmp.ne.s32.totalorder %s65, %s67
    %p71 = scmp.eq.s32.totalorder %s10, 0
    %p72 = por %p70, %p71
    %p73 = scmp.ne.s32.totalorder %s65, %s67
    %p74 = scmp.eq.s32.totalorder %s15, 1
    %p75 = por %p73, %p74
    %p76 = scmp.ne.s32.totalorder %s67, %s68
    %p77 = scmp.eq.s32.totalorder %s15, 0
    %p78 = por %p76, %p77
    %p79 = scmp.ne.s32.totalorder %s67, %s68
    %p80 = scmp.eq.s32.totalorder %s16, 1
    %p81 = por %p79, %p80
    %p83 = scmp.ne.s32.totalorder %s68, %s82
    %p84 = scmp.eq.s32.totalorder %s16, 0
    %p85 = por %p83, %p84
    %s87 = sadd.s32 %s86, 1
    %p90 = scmp.eq.s32.totalorder %s10, 1
    %p91 = scmp.ne.s32.totalorder %s86, %s88
    %p92 = scmp.eq.s32.totalorder %s10, 0
    %p93 = por %p91, %p92
    %p94 = scmp.ne.s32.totalorder %s86, %s88
    %p95 = scmp.eq.s32.totalorder %s15, 1
    %p96 = por %p94, %p95
    %p97 = scmp.ne.s32.totalorder %s88, %s89
    %p98 = scmp.eq.s32.totalorder %s15, 0
    %p99 = por %p97, %p98
    %p100 = scmp.ne.s32.totalorder %s88, %s89
    %p101 = scmp.eq.s32.totalorder %s16, 1
    %p102 = por %p100, %p101
    %p104 = scmp.ne.s32.totalorder %s89, %s103
    %p105 = scmp.eq.s32.totalorder %s16, 0
    %p106 = por %p104, %p105
    %s107 = ssub.s32 %s10, %s17
    %p108 = scmp.eq.s32.totalorder %s107, 0
    %s110 = sadd.s32 %s109, 1
    %s111 = scalar_select %p108, %s109, %s110
    %p114 = pneg %p108
    %p115 = scmp.eq.s32.totalorder %s10, 1
    %p116 = por %p114, %p115
    %p117 = scmp.ne.s32.totalorder %s109, %s112
    %p118 = scmp.eq.s32.totalorder %s10, 0
    %p119 = por %p117, %p118
    %p120 = scmp.ne.s32.totalorder %s109, %s112
    %p121 = scmp.eq.s32.totalorder %s15, 1
    %p122 = por %p120, %p121
    %p123 = scmp.ne.s32.totalorder %s112, %s113
    %p124 = scmp.eq.s32.totalorder %s15, 0
    %p125 = por %p123, %p124
    %p126 = scmp.ne.s32.totalorder %s112, %s113
    %p127 = scmp.eq.s32.totalorder %s16, 1
    %p128 = por %p126, %p127
    %p130 = scmp.ne.s32.totalorder %s113, %s129
    %p131 = scmp.eq.s32.totalorder %s16, 0
    %p132 = por %p130, %p131
    %p133 = scmp.le.s32.totalorder 1, %s10
    %p134 = scmp.lt.s32.totalorder %s10, 3
    %p135 = pnand %p133, %p134
    %p136 = pneg %p135
    // Predicated region
    $region9: #{vgg_block_3d.1} parent=5 // pred_check
      _
    $region10: #{vgg_block_3d.1} parent=5 // pred_check_branch
      %138 = sbr.rel (%p135) target = $region12
    $region11: #{vgg_block_3d.1} parent=5 // pred_region
      %s139 = ssub.s32 %s10, 1
      // Predicated region
      $region13: #{vgg_block_3d.1} parent=11 // pred_check
        %p140 = pneg %p57
      $region14: #{vgg_block_3d.1} parent=11 // pred_check_branch
        %142 = sbr.rel (%p140) target = $region16
      $region15: #{vgg_block_3d.1} parent=11 // pred_region
        _
      $region16: #{vgg_block_3d.1} parent=11 // pred_fallthru
        _
      // Predicated region
      $region17: #{vgg_block_3d.1} parent=11 // pred_check
        %p143 = pneg %p78
      $region18: #{vgg_block_3d.1} parent=11 // pred_check_branch
        %145 = sbr.rel (%p143) target = $region20
      $region19: #{vgg_block_3d.1} parent=11 // pred_region
        _
      $region20: #{vgg_block_3d.1} parent=11 // pred_fallthru
        _
      // Predicated region
      $region21: #{vgg_block_3d.1} parent=11 // pred_check
        %p146 = pneg %p99
      $region22: #{vgg_block_3d.1} parent=11 // pred_check_branch
        %148 = sbr.rel (%p146) target = $region24
      $region23: #{vgg_block_3d.1} parent=11 // pred_region
        _
      $region24: #{vgg_block_3d.1} parent=11 // pred_fallthru
        _
    $region12: #{vgg_block_3d.1} parent=5 // pred_fallthru
      _
    %p149 = scmp.lt.s32.totalorder %s10, 2
    // Predicated region
    $region25: #{vgg_block_3d.1} parent=5 // pred_check
      %p150 = pneg %p149
    $region26: #{vgg_block_3d.1} parent=5 // pred_check_branch
      %152 = sbr.rel (%p150) target = $region28
    $region27: #{vgg_block_3d.1} parent=5 // pred_region
      // Predicated region
      $region29: #{vgg_block_3d.1} parent=27 // pred_check
        %p153 = pneg %p30
      $region30: #{vgg_block_3d.1} parent=27 // pred_check_branch
        %155 = sbr.rel (%p153) target = $region32
      $region31: #{vgg_block_3d.1} parent=27 // pred_region
        %p156 = scmp.lt.s32.totalorder %s10, 1
        %s157 = scalar_select %p156, %s10, 1
        %s158 = smul.addr %s157, 4
        %s159 = smul.addr %s158, 8
        %s160 = scalar_lea.vmem %s0, %s159
      $region32: #{vgg_block_3d.1} parent=27 // pred_fallthru
        _
    $region28: #{vgg_block_3d.1} parent=5 // pred_fallthru
      _
    %p161 = scmp.le.s32.totalorder 1, %s10
    %p162 = scmp.lt.s32.totalorder %s10, 3
    %p163 = pnand %p161, %p162
    %p164 = pneg %p163
    // Predicated region
    $region33: #{vgg_block_3d.1} parent=5 // pred_check
      _
    $region34: #{vgg_block_3d.1} parent=5 // pred_check_branch
      %166 = sbr.rel (%p163) target = $region36
    $region35: #{vgg_block_3d.1} parent=5 // pred_region
      %s167 = ssub.s32 %s10, 1
      %p168 = scmp.lt.s32.totalorder %s15, 1
      %s169 = scalar_select %p168, %s15, 1
      %s170 = smul.addr %s169, 4
      %s171 = smul.addr %s170, 8
      %s172 = scalar_lea.vmem %s0, %s171
      %p173 = pneg %p36
      %p174 = pneg %p33
      %p175 = pneg %p57
      %p176 = pneg %p54
      %p177 = pneg %p78
      %p178 = pneg %p75
      %p179 = pneg %p99
      %p180 = pneg %p96
      %p181 = pneg %p125
      %p182 = pneg %p122
      %p183 = scmp.lt.s32.totalorder %s15, 1
      %s184 = scalar_select %p183, %s15, 1
      %s185 = smul.addr %s184, 4
      %s186 = smul.addr %s185, 8
      %s187 = scalar_lea.vmem %s4, %s186
      %p188 = scmp.lt.s32.totalorder %s15, 1
      %s189 = scalar_select %p188, %s15, 1
      %s190 = smul.addr %s189, 4
      %s191 = smul.addr %s190, 8
      %s192 = scalar_lea.vmem %s0, %s191
      %p193 = scmp.lt.s32.totalorder %s15, 1
      %s194 = scalar_select %p193, %s15, 1
      %s195 = smul.addr %s194, 4
      %s196 = smul.addr %s195, 8
      %s197 = scalar_lea.vmem %s4, %s196
      %v198 = vld [vmem:[%s3] sm:$0xff]
      %v199 = vld [vmem:[%s3 + $0x8] sm:$0xff]
      %v200 = vld [vmem:[%s3 + $0x10] sm:$0xff]
      %v201 = vld [vmem:[%s3 + $0x18] sm:$0xff]
      %v202 = vld [vmem:[%s192] sm:$0xff]
      %v203 = vld [vmem:[%s192 + $0x8] sm:$0xff]
      %v204 = vld [vmem:[%s192 + $0x10] sm:$0xff]
      %v205 = vld [vmem:[%s192 + $0x18] sm:$0xff]
      %v206 = vld [vmem:[%s1] sm:$0xff]
      %207 = vrot.lane.b32.xlu0 %v202, 73
      %v208 = vpop.permute.xlu0 %207
      %209 = vrot.lane.b32.xlu0 %v203, 73
      %v210 = vpop.permute.xlu0 %209
      %211 = vrot.lane.b32.xlu0 %v204, 73
      %v212 = vpop.permute.xlu0 %211
      %213 = vrot.lane.b32.xlu0 %v205, 73
      %v214 = vpop.permute.xlu0 %213
      %v215 = vlaneseq
      %v216 = vand.u32 %v215, 127
      %vm217 = vcmp.lt.s32.totalorder %v216, 73
      %v218 = vsel %vm217, %v212, %v214
      %v219 = vsel %vm217, %v210, %v212
      %v220 = vsel %vm217, %v208, %v210
      %v221 = vsel %vm217, %v214, %v208
      %v222 = vlaneseq
      %v223 = vshrl.u32 %v222, 7
      %v224 = vsub.s32 0, %v223
      %v225 = vrot.slane %v198, %v224
      %v226 = vlaneseq
      %v227 = vshrl.u32 %v226, 7
      %v228 = vsub.s32 0, %v227
      %v229 = vrot.slane %v199, %v228
      %v230 = vlaneseq
      %v231 = vshrl.u32 %v230, 7
      %v232 = vsub.s32 0, %v231
      %v233 = vrot.slane %v200, %v232
      %v234 = vlaneseq
      %v235 = vshrl.u32 %v234, 7
      %v236 = vsub.s32 0, %v235
      %v237 = vrot.slane %v201, %v236
      %v238 = vmul.f32 %v221, %v225
      %v239 = vmul.f32 %v220, %v229
      %v240 = vmul.f32 %v219, %v233
      %v241 = vmul.f32 %v218, %v237
      %242 = vrot.lane.b32.xlu0 %v202, 71
      %v243 = vpop.permute.xlu0 %242
      %244 = vrot.lane.b32.xlu0 %v203, 71
      %v245 = vpop.permute.xlu0 %244
      %246 = vrot.lane.b32.xlu0 %v204, 71
      %v247 = vpop.permute.xlu0 %246
      %248 = vrot.lane.b32.xlu0 %v205, 71
      %v249 = vpop.permute.xlu0 %248
      %vm250 = vcmp.lt.s32.totalorder %v216, 71
      %v251 = vsel %vm250, %v247, %v249
      %v252 = vsel %vm250, %v245, %v247
      %v253 = vsel %vm250, %v243, %v245
      %v254 = vsel %vm250, %v249, %v243
      %v255 = vlaneseq
      %v256 = vshrl.u32 %v255, 7
      %v257 = vsub.s32 1, %v256
      %v258 = vrot.slane %v198, %v257
      %v259 = vlaneseq
      %v260 = vshrl.u32 %v259, 7
      %v261 = vsub.s32 1, %v260
      %v262 = vrot.slane %v199, %v261
      %v263 = vlaneseq
      %v264 = vshrl.u32 %v263, 7
      %v265 = vsub.s32 1, %v264
      %v266 = vrot.slane %v200, %v265
      %v267 = vlaneseq
      %v268 = vshrl.u32 %v267, 7
      %v269 = vsub.s32 1, %v268
      %v270 = vrot.slane %v201, %v269
      %v271 = vmul.f32 %v254, %v258
      %v272 = vmul.f32 %v253, %v262
      %v273 = vmul.f32 %v252, %v266
      %v274 = vmul.f32 %v251, %v270
      %275 = vrot.lane.b32.xlu0 %v202, 57
      %v276 = vpop.permute.xlu0 %275
      %277 = vrot.lane.b32.xlu0 %v203, 57
      %v278 = vpop.permute.xlu0 %277
      %279 = vrot.lane.b32.xlu0 %v204, 57
      %v280 = vpop.permute.xlu0 %279
      %281 = vrot.lane.b32.xlu0 %v205, 57
      %v282 = vpop.permute.xlu0 %281
      %vm283 = vcmp.lt.s32.totalorder %v216, 57
      %v284 = vsel %vm283, %v280, %v282
      %v285 = vsel %vm283, %v278, %v280
      %v286 = vsel %vm283, %v276, %v278
      %v287 = vsel %vm283, %v282, %v276
      %v288 = vlaneseq
      %v289 = vshrl.u32 %v288, 7
      %v290 = vsub.s32 2, %v289
      %v291 = vrot.slane %v198, %v290
      %v292 = vlaneseq
      %v293 = vshrl.u32 %v292, 7
      %v294 = vsub.s32 2, %v293
      %v295 = vrot.slane %v199, %v294
      %v296 = vlaneseq
      %v297 = vshrl.u32 %v296, 7
      %v298 = vsub.s32 2, %v297
      %v299 = vrot.slane %v200, %v298
      %v300 = vlaneseq
      %v301 = vshrl.u32 %v300, 7
      %v302 = vsub.s32 2, %v301
      %v303 = vrot.slane %v201, %v302
      %v304 = vmul.f32 %v287, %v291
      %v305 = vmul.f32 %v286, %v295
      %v306 = vmul.f32 %v285, %v299
      %v307 = vmul.f32 %v284, %v303
      %308 = vrot.lane.b32.xlu0 %v202, 55
      %v309 = vpop.permute.xlu0 %308
      %310 = vrot.lane.b32.xlu0 %v203, 55
      %v311 = vpop.permute.xlu0 %310
      %312 = vrot.lane.b32.xlu0 %v204, 55
      %v313 = vpop.permute.xlu0 %312
      %314 = vrot.lane.b32.xlu0 %v205, 55
      %v315 = vpop.permute.xlu0 %314
      %vm316 = vcmp.lt.s32.totalorder %v216, 55
      %v317 = vsel %vm316, %v313, %v315
      %v318 = vsel %vm316, %v311, %v313
      %v319 = vsel %vm316, %v309, %v311
      %v320 = vsel %vm316, %v315, %v309
      %v321 = vlaneseq
      %v322 = vshrl.u32 %v321, 7
      %v323 = vsub.s32 3, %v322
      %v324 = vrot.slane %v198, %v323
      %v325 = vlaneseq
      %v326 = vshrl.u32 %v325, 7
      %v327 = vsub.s32 3, %v326
      %v328 = vrot.slane %v199, %v327
      %v329 = vlaneseq
      %v330 = vshrl.u32 %v329, 7
      %v331 = vsub.s32 3, %v330
      %v332 = vrot.slane %v200, %v331
      %v333 = vlaneseq
      %v334 = vshrl.u32 %v333, 7
      %v335 = vsub.s32 3, %v334
      %v336 = vrot.slane %v201, %v335
      %v337 = vmul.f32 %v320, %v324
      %v338 = vmul.f32 %v319, %v328
      %v339 = vmul.f32 %v318, %v332
      %v340 = vmul.f32 %v317, %v336
      %v341 = vlaneseq
      %v342 = vshrl.u32 %v341, 7
      %v343 = vsub.s32 4, %v342
      %v344 = vrot.slane %v198, %v343
      %v345 = vlaneseq
      %v346 = vshrl.u32 %v345, 7
      %v347 = vsub.s32 4, %v346
      %v348 = vrot.slane %v199, %v347
      %v349 = vlaneseq
      %v350 = vshrl.u32 %v349, 7
      %v351 = vsub.s32 4, %v350
      %v352 = vrot.slane %v200, %v351
      %v353 = vlaneseq
      %v354 = vshrl.u32 %v353, 7
      %v355 = vsub.s32 4, %v354
      %v356 = vrot.slane %v201, %v355
      %v357 = vmul.f32 %v220, %v344
      %v358 = vmul.f32 %v219, %v348
      %v359 = vmul.f32 %v218, %v352
      %v360 = vmul.f32 %v221, %v356
      %v361 = vlaneseq
      %v362 = vshrl.u32 %v361, 7
      %v363 = vsub.s32 5, %v362
      %v364 = vrot.slane %v198, %v363
      %v365 = vlaneseq
      %v366 = vshrl.u32 %v365, 7
      %v367 = vsub.s32 5, %v366
      %v368 = vrot.slane %v199, %v367
      %v369 = vlaneseq
      %v370 = vshrl.u32 %v369, 7
      %v371 = vsub.s32 5, %v370
      %v372 = vrot.slane %v200, %v371
      %v373 = vlaneseq
      %v374 = vshrl.u32 %v373, 7
      %v375 = vsub.s32 5, %v374
      %v376 = vrot.slane %v201, %v375
      %v377 = vmul.f32 %v253, %v364
      %v378 = vmul.f32 %v252, %v368
      %v379 = vmul.f32 %v251, %v372
      %v380 = vmul.f32 %v254, %v376
      %v381 = vlaneseq
      %v382 = vshrl.u32 %v381, 7
      %v383 = vsub.s32 6, %v382
      %v384 = vrot.slane %v198, %v383
      %v385 = vlaneseq
      %v386 = vshrl.u32 %v385, 7
      %v387 = vsub.s32 6, %v386
      %v388 = vrot.slane %v199, %v387
      %v389 = vlaneseq
      %v390 = vshrl.u32 %v389, 7
      %v391 = vsub.s32 6, %v390
      %v392 = vrot.slane %v200, %v391
      %v393 = vlaneseq
      %v394 = vshrl.u32 %v393, 7
      %v395 = vsub.s32 6, %v394
      %v396 = vrot.slane %v201, %v395
      %v397 = vmul.f32 %v286, %v384
      %v398 = vmul.f32 %v285, %v388
      %v399 = vmul.f32 %v284, %v392
      %v400 = vmul.f32 %v287, %v396
      %v401 = vlaneseq
      %v402 = vshrl.u32 %v401, 7
      %v403 = vsub.s32 7, %v402
      %v404 = vrot.slane %v198, %v403
      %v405 = vlaneseq
      %v406 = vshrl.u32 %v405, 7
      %v407 = vsub.s32 7, %v406
      %v408 = vrot.slane %v199, %v407
      %v409 = vlaneseq
      %v410 = vshrl.u32 %v409, 7
      %v411 = vsub.s32 7, %v410
      %v412 = vrot.slane %v200, %v411
      %v413 = vlaneseq
      %v414 = vshrl.u32 %v413, 7
      %v415 = vsub.s32 7, %v414
      %v416 = vrot.slane %v201, %v415
      %v417 = vmul.f32 %v319, %v404
      %v418 = vmul.f32 %v318, %v408
      %v419 = vmul.f32 %v317, %v412
      %v420 = vmul.f32 %v320, %v416
      %vm421 = vcmask 523264
      %v423 = vsel %vm421, %v206, 0
      %425 = vmatprep.subr.mxu0 %v239
      %426 = vmatpush1.msra.mxu0 %v238
      %427 = vmatprep.subr.mxu0 %v272
      %428 = vmatpush1.msra.mxu0 %v271
      %429 = vmatprep.subr.mxu0 %v305
      %430 = vmatpush1.msra.mxu0 %v304
      %431 = vmatprep.subr.mxu0 %v338
      %432 = vmatpush1.msra.mxu0 %v337
      %433 = vmatprep.subr.mxu0 %v358
      %434 = vmatpush1.msra.mxu0 %v357
      %435 = vmatprep.subr.mxu0 %v378
      %436 = vmatpush1.msra.mxu0 %v377
      %437 = vmatprep.subr.mxu0 %v398
      %438 = vmatpush1.msra.mxu0 %v397
      %439 = vmatprep.subr.mxu0 %v418
      %440 = vmatpush1.msra.mxu0 %v417
      %441 = vmatprep.subr.mxu0 0.0
      %442 = vmatpush1.msra.mxu0 0.0
      %443 = vmatprep.subr.mxu0 0.0
      %444 = vmatpush1.msra.mxu0 0.0
      %445 = vmatprep.subr.mxu0 0.0
      %446 = vmatpush1.msra.mxu0 0.0
      %447 = vmatprep.subr.mxu0 0.0
      %448 = vmatpush1.msra.mxu0 0.0
      %449 = vmatprep.subr.mxu0 0.0
      %450 = vmatpush1.msra.mxu0 0.0
      %451 = vmatprep.subr.mxu0 0.0
      %452 = vmatpush1.msra.mxu0 0.0
      %453 = vmatprep.subr.mxu0 0.0
      %454 = vmatpush1.msra.mxu0 0.0
      %455 = vmatprep.subr.mxu0 0.0
      %456 = vmatpush1.msra.mxu0 0.0
      %457 = vmatprep.subr.mxu0 0.0
      %458 = vmatpush1.msra.mxu0 0.0
      %459 = vmatprep.subr.mxu0 0.0
      %460 = vmatpush1.msra.mxu0 0.0
      %461 = vmatprep.subr.mxu0 0.0
      %462 = vmatpush1.msra.mxu0 0.0
      %463 = vmatprep.subr.mxu0 0.0
      %464 = vmatpush1.msra.mxu0 0.0
      %465 = vmatprep.subr.mxu0 0.0
      %466 = vmatpush1.msra.mxu0 0.0
      %467 = vmatprep.subr.mxu0 0.0
      %468 = vmatpush1.msra.mxu0 0.0
      %469 = vmatprep.subr.mxu0 0.0
      %470 = vmatpush1.msra.mxu0 0.0
      %471 = vmatprep.subr.mxu0 0.0
      %472 = vmatpush1.msra.mxu0 0.0
      %473 = vmatprep.subr.mxu0 0.0
      %474 = vmatpush1.msra.mxu0 0.0
      %475 = vmatprep.subr.mxu0 0.0
      %476 = vmatpush1.msra.mxu0 0.0
      %477 = vmatprep.subr.mxu0 0.0
      %478 = vmatpush1.msra.mxu0 0.0
      %479 = vmatprep.subr.mxu0 0.0
      %480 = vmatpush1.msra.mxu0 0.0
      %481 = vmatprep.subr.mxu0 0.0
      %482 = vmatpush1.msra.mxu0 0.0
      %483 = vmatprep.subr.mxu0 0.0
      %484 = vmatpush1.msra.mxu0 0.0
      %485 = vmatprep.subr.mxu0 0.0
      %486 = vmatpush1.msra.mxu0 0.0
      %487 = vmatprep.subr.mxu0 0.0
      %488 = vmatpush1.msra.mxu0 0.0
      %489 = vmatprep.mubr.f32.mxu0 0.0
      %490 = vmatmul.mubr.f32.gmra.mrb[0].mxu0 %v423
      %v491 = vpop.f32.mrb[0].mxu0
      %v492 = vadd.f32 0.0, %v491
      %v493 = vpop.f32.mrb[0].mxu0
      %v494 = vadd.f32 0.0, %v493
      %495 = vdwg.mxu0
      %496 = vmatprep.subr.mxu0 %v241
      %497 = vmatpush1.msra.mxu0 %v240
      %498 = vmatprep.subr.mxu0 %v274
      %499 = vmatpush1.msra.mxu0 %v273
      %500 = vmatprep.subr.mxu0 %v307
      %501 = vmatpush1.msra.mxu0 %v306
      %502 = vmatprep.subr.mxu0 %v340
      %503 = vmatpush1.msra.mxu0 %v339
      %504 = vmatprep.subr.mxu0 %v360
      %505 = vmatpush1.msra.mxu0 %v359
      %506 = vmatprep.subr.mxu0 %v380
      %507 = vmatpush1.msra.mxu0 %v379
      %508 = vmatprep.subr.mxu0 %v400
      %509 = vmatpush1.msra.mxu0 %v399
      %510 = vmatprep.subr.mxu0 %v420
      %511 = vmatpush1.msra.mxu0 %v419
      %512 = vmatprep.subr.mxu0 0.0
      %513 = vmatpush1.msra.mxu0 0.0
      %514 = vmatprep.subr.mxu0 0.0
      %515 = vmatpush1.msra.mxu0 0.0
      %516 = vmatprep.subr.mxu0 0.0
      %517 = vmatpush1.msra.mxu0 0.0
      %518 = vmatprep.subr.mxu0 0.0
      %519 = vmatpush1.msra.mxu0 0.0
      %520 = vmatprep.subr.mxu0 0.0
      %521 = vmatpush1.msra.mxu0 0.0
      %522 = vmatprep.subr.mxu0 0.0
      %523 = vmatpush1.msra.mxu0 0.0
      %524 = vmatprep.subr.mxu0 0.0
      %525 = vmatpush1.msra.mxu0 0.0
      %526 = vmatprep.subr.mxu0 0.0
      %527 = vmatpush1.msra.mxu0 0.0
      %528 = vmatprep.subr.mxu0 0.0
      %529 = vmatpush1.msra.mxu0 0.0
      %530 = vmatprep.subr.mxu0 0.0
      %531 = vmatpush1.msra.mxu0 0.0
      %532 = vmatprep.subr.mxu0 0.0
      %533 = vmatpush1.msra.mxu0 0.0
      %534 = vmatprep.subr.mxu0 0.0
      %535 = vmatpush1.msra.mxu0 0.0
      %536 = vmatprep.subr.mxu0 0.0
      %537 = vmatpush1.msra.mxu0 0.0
      %538 = vmatprep.subr.mxu0 0.0
      %539 = vmatpush1.msra.mxu0 0.0
      %540 = vmatprep.subr.mxu0 0.0
      %541 = vmatpush1.msra.mxu0 0.0
      %542 = vmatprep.subr.mxu0 0.0
      %543 = vmatpush1.msra.mxu0 0.0
      %544 = vmatprep.subr.mxu0 0.0
      %545 = vmatpush1.msra.mxu0 0.0
      %546 = vmatprep.subr.mxu0 0.0
      %547 = vmatpush1.msra.mxu0 0.0
      %548 = vmatprep.subr.mxu0 0.0
      %549 = vmatpush1.msra.mxu0 0.0
      %550 = vmatprep.subr.mxu0 0.0
      %551 = vmatpush1.msra.mxu0 0.0
      %552 = vmatprep.subr.mxu0 0.0
      %553 = vmatpush1.msra.mxu0 0.0
      %554 = vmatprep.subr.mxu0 0.0
      %555 = vmatpush1.msra.mxu0 0.0
      %556 = vmatprep.subr.mxu0 0.0
      %557 = vmatpush1.msra.mxu0 0.0
      %558 = vmatprep.subr.mxu0 0.0
      %559 = vmatpush1.msra.mxu0 0.0
      %560 = vmatprep.mubr.f32.mxu0 0.0
      %561 = vmatmul.mubr.f32.gmra.mrb[0].mxu0 %v423
      %v562 = vpop.f32.mrb[0].mxu0
      %v563 = vadd.f32 0.0, %v562
      %v564 = vpop.f32.mrb[0].mxu0
      %v565 = vadd.f32 0.0, %v564
      %566 = vdwg.mxu0
      %v567 = vadd.f32 %v492, %v494
      %v568 = vadd.f32 %v567, %v563
      %v569 = vadd.f32 %v568, %v565
      %570 = vadd.xlane.f32.xlu0 %v569
      %v571 = vpop.xlane.xlu0 %570
      %v572 = vmul.f32 %v571, 0.001953125
      %v573 = vmul.f32 %v492, %v492
      %v574 = vmul.f32 %v494, %v494
      %v575 = vmul.f32 %v563, %v563
      %v576 = vmul.f32 %v565, %v565
      %v577 = vadd.f32 %v573, %v574
      %v578 = vadd.f32 %v577, %v575
      %v579 = vadd.f32 %v578, %v576
      %580 = vadd.xlane.f32.xlu0 %v579
      %v581 = vpop.xlane.xlu0 %580
      %v582 = vmul.f32 %v581, 0.001953125
      %v583 = vmul.f32 %v572, %v572
      %v584 = vsub.f32 %v582, %v583
      %v585 = vsub.f32 %v492, %v572
      %v586 = vsub.f32 %v494, %v572
      %v587 = vsub.f32 %v563, %v572
      %v588 = vsub.f32 %v565, %v572
      %v589 = vadd.f32 %v584, 1e-05
      %v590 = vrsqrt.pop %v589
      %v591 = vmul.f32 %v585, %v590
      %v592 = vmul.f32 %v586, %v590
      %v593 = vmul.f32 %v587, %v590
      %v594 = vmul.f32 %v588, %v590
      %vm595 = vcmp.ge.f32.partialorder %v591, 0.0
      %vm596 = vcmp.ge.f32.partialorder %v592, 0.0
      %vm597 = vcmp.ge.f32.partialorder %v593, 0.0
      %vm598 = vcmp.ge.f32.partialorder %v594, 0.0
      %v599 = vmul.f32 %v591, 0.1
      %v600 = vmul.f32 %v592, 0.1
      %v601 = vmul.f32 %v593, 0.1
      %v602 = vmul.f32 %v594, 0.1
      %v603 = vsel %vm595, %v591, %v599
      %v604 = vsel %vm596, %v592, %v600
      %v605 = vsel %vm597, %v593, %v601
      %v606 = vsel %vm598, %v594, %v602
      %v607 = vld [vmem:[%s2] sm:$0xff]
      %608 = vrot.lane.b32.xlu0 %v603, 73
      %v609 = vpop.permute.xlu0 %608
      %610 = vrot.lane.b32.xlu0 %v604, 73
      %v611 = vpop.permute.xlu0 %610
      %612 = vrot.lane.b32.xlu0 %v605, 73
      %v613 = vpop.permute.xlu0 %612
      %614 = vrot.lane.b32.xlu0 %v606, 73
      %v615 = vpop.permute.xlu0 %614
      %v616 = vsel %vm217, %v613, %v615
      %v617 = vsel %vm217, %v611, %v613
      %v618 = vsel %vm217, %v609, %v611
      %v619 = vsel %vm217, %v615, %v609
      %v620 = vmul.f32 %v619, %v225
      %v621 = vmul.f32 %v618, %v229
      %v622 = vmul.f32 %v617, %v233
      %v623 = vmul.f32 %v616, %v237
      %624 = vrot.lane.b32.xlu0 %v603, 71
      %v625 = vpop.permute.xlu0 %624
      %626 = vrot.lane.b32.xlu0 %v604, 71
      %v627 = vpop.permute.xlu0 %626
      %628 = vrot.lane.b32.xlu0 %v605, 71
      %v629 = vpop.permute.xlu0 %628
      %630 = vrot.lane.b32.xlu0 %v606, 71
      %v631 = vpop.permute.xlu0 %630
      %v632 = vsel %vm250, %v629, %v631
      %v633 = vsel %vm250, %v627, %v629
      %v634 = vsel %vm250, %v625, %v627
      %v635 = vsel %vm250, %v631, %v625
      %v636 = vmul.f32 %v635, %v258
      %v637 = vmul.f32 %v634, %v262
      %v638 = vmul.f32 %v633, %v266
      %v639 = vmul.f32 %v632, %v270
      %640 = vrot.lane.b32.xlu0 %v603, 57
      %v641 = vpop.permute.xlu0 %640
      %642 = vrot.lane.b32.xlu0 %v604, 57
      %v643 = vpop.permute.xlu0 %642
      %644 = vrot.lane.b32.xlu0 %v605, 57
      %v645 = vpop.permute.xlu0 %644
      %646 = vrot.lane.b32.xlu0 %v606, 57
      %v647 = vpop.permute.xlu0 %646
      %v648 = vsel %vm283, %v645, %v647
      %v649 = vsel %vm283, %v643, %v645
      %v650 = vsel %vm283, %v641, %v643
      %v651 = vsel %vm283, %v647, %v641
      %v652 = vmul.f32 %v651, %v291
      %v653 = vmul.f32 %v650, %v295
      %v654 = vmul.f32 %v649, %v299
      %v655 = vmul.f32 %v648, %v303
      %656 = vrot.lane.b32.xlu0 %v603, 55
      %v657 = vpop.permute.xlu0 %656
      %658 = vrot.lane.b32.xlu0 %v604, 55
      %v659 = vpop.permute.xlu0 %658
      %660 = vrot.lane.b32.xlu0 %v605, 55
      %v661 = vpop.permute.xlu0 %660
      %662 = vrot.lane.b32.xlu0 %v606, 55
      %v663 = vpop.permute.xlu0 %662
      %v664 = vsel %vm316, %v661, %v663
      %v665 = vsel %vm316, %v659, %v661
      %v666 = vsel %vm316, %v657, %v659
      %v667 = vsel %vm316, %v663, %v657
      %v668 = vmul.f32 %v667, %v324
      %v669 = vmul.f32 %v666, %v328
      %v670 = vmul.f32 %v665, %v332
      %v671 = vmul.f32 %v664, %v336
      %v672 = vmul.f32 %v618, %v344
      %v673 = vmul.f32 %v617, %v348
      %v674 = vmul.f32 %v616, %v352
      %v675 = vmul.f32 %v619, %v356
      %v676 = vmul.f32 %v634, %v364
      %v677 = vmul.f32 %v633, %v368
      %v678 = vmul.f32 %v632, %v372
      %v679 = vmul.f32 %v635, %v376
      %v680 = vmul.f32 %v650, %v384
      %v681 = vmul.f32 %v649, %v388
      %v682 = vmul.f32 %v648, %v392
      %v683 = vmul.f32 %v651, %v396
      %v684 = vmul.f32 %v666, %v404
      %v685 = vmul.f32 %v665, %v408
      %v686 = vmul.f32 %v664, %v412
      %v687 = vmul.f32 %v667, %v416
      %v689 = vsel %vm421, %v607, 0
      %691 = vmatprep.subr.mxu0 %v621
      %692 = vmatpush1.msra.mxu0 %v620
      %693 = vmatprep.subr.mxu0 %v637
      %694 = vmatpush1.msra.mxu0 %v636
      %695 = vmatprep.subr.mxu0 %v653
      %696 = vmatpush1.msra.mxu0 %v652
      %697 = vmatprep.subr.mxu0 %v669
      %698 = vmatpush1.msra.mxu0 %v668
      %699 = vmatprep.subr.mxu0 %v673
      %700 = vmatpush1.msra.mxu0 %v672
      %701 = vmatprep.subr.mxu0 %v677
      %702 = vmatpush1.msra.mxu0 %v676
      %703 = vmatprep.subr.mxu0 %v681
      %704 = vmatpush1.msra.mxu0 %v680
      %705 = vmatprep.subr.mxu0 %v685
      %706 = vmatpush1.msra.mxu0 %v684
      %707 = vmatprep.subr.mxu0 0.0
      %708 = vmatpush1.msra.mxu0 0.0
      %709 = vmatprep.subr.mxu0 0.0
      %710 = vmatpush1.msra.mxu0 0.0
      %711 = vmatprep.subr.mxu0 0.0
      %712 = vmatpush1.msra.mxu0 0.0
      %713 = vmatprep.subr.mxu0 0.0
      %714 = vmatpush1.msra.mxu0 0.0
      %715 = vmatprep.subr.mxu0 0.0
      %716 = vmatpush1.msra.mxu0 0.0
      %717 = vmatprep.subr.mxu0 0.0
      %718 = vmatpush1.msra.mxu0 0.0
      %719 = vmatprep.subr.mxu0 0.0
      %720 = vmatpush1.msra.mxu0 0.0
      %721 = vmatprep.subr.mxu0 0.0
      %722 = vmatpush1.msra.mxu0 0.0
      %723 = vmatprep.subr.mxu0 0.0
      %724 = vmatpush1.msra.mxu0 0.0
      %725 = vmatprep.subr.mxu0 0.0
      %726 = vmatpush1.msra.mxu0 0.0
      %727 = vmatprep.subr.mxu0 0.0
      %728 = vmatpush1.msra.mxu0 0.0
      %729 = vmatprep.subr.mxu0 0.0
      %730 = vmatpush1.msra.mxu0 0.0
      %731 = vmatprep.subr.mxu0 0.0
      %732 = vmatpush1.msra.mxu0 0.0
      %733 = vmatprep.subr.mxu0 0.0
      %734 = vmatpush1.msra.mxu0 0.0
      %735 = vmatprep.subr.mxu0 0.0
      %736 = vmatpush1.msra.mxu0 0.0
      %737 = vmatprep.subr.mxu0 0.0
      %738 = vmatpush1.msra.mxu0 0.0
      %739 = vmatprep.subr.mxu0 0.0
      %740 = vmatpush1.msra.mxu0 0.0
      %741 = vmatprep.subr.mxu0 0.0
      %742 = vmatpush1.msra.mxu0 0.0
      %743 = vmatprep.subr.mxu0 0.0
      %744 = vmatpush1.msra.mxu0 0.0
      %745 = vmatprep.subr.mxu0 0.0
      %746 = vmatpush1.msra.mxu0 0.0
      %747 = vmatprep.subr.mxu0 0.0
      %748 = vmatpush1.msra.mxu0 0.0
      %749 = vmatprep.subr.mxu0 0.0
      %750 = vmatpush1.msra.mxu0 0.0
      %751 = vmatprep.subr.mxu0 0.0
      %752 = vmatpush1.msra.mxu0 0.0
      %753 = vmatprep.subr.mxu0 0.0
      %754 = vmatpush1.msra.mxu0 0.0
      %755 = vmatprep.mubr.f32.mxu0 0.0
      %756 = vmatmul.mubr.f32.gmra.mrb[0].mxu0 %v689
      %v757 = vpop.f32.mrb[0].mxu0
      %v758 = vadd.f32 0.0, %v757
      %v759 = vpop.f32.mrb[0].mxu0
      %v760 = vadd.f32 0.0, %v759
      %761 = vdwg.mxu0
      %762 = vmatprep.subr.mxu0 %v623
      %763 = vmatpush1.msra.mxu0 %v622
      %764 = vmatprep.subr.mxu0 %v639
      %765 = vmatpush1.msra.mxu0 %v638
      %766 = vmatprep.subr.mxu0 %v655
      %767 = vmatpush1.msra.mxu0 %v654
      %768 = vmatprep.subr.mxu0 %v671
      %769 = vmatpush1.msra.mxu0 %v670
      %770 = vmatprep.subr.mxu0 %v675
      %771 = vmatpush1.msra.mxu0 %v674
      %772 = vmatprep.subr.mxu0 %v679
      %773 = vmatpush1.msra.mxu0 %v678
      %774 = vmatprep.subr.mxu0 %v683
      %775 = vmatpush1.msra.mxu0 %v682
      %776 = vmatprep.subr.mxu0 %v687
      %777 = vmatpush1.msra.mxu0 %v686
      %778 = vmatprep.subr.mxu0 0.0
      %779 = vmatpush1.msra.mxu0 0.0
      %780 = vmatprep.subr.mxu0 0.0
      %781 = vmatpush1.msra.mxu0 0.0
      %782 = vmatprep.subr.mxu0 0.0
      %783 = vmatpush1.msra.mxu0 0.0
      %784 = vmatprep.subr.mxu0 0.0
      %785 = vmatpush1.msra.mxu0 0.0
      %786 = vmatprep.subr.mxu0 0.0
      %787 = vmatpush1.msra.mxu0 0.0
      %788 = vmatprep.subr.mxu0 0.0
      %789 = vmatpush1.msra.mxu0 0.0
      %790 = vmatprep.subr.mxu0 0.0
      %791 = vmatpush1.msra.mxu0 0.0
      %792 = vmatprep.subr.mxu0 0.0
      %793 = vmatpush1.msra.mxu0 0.0
      %794 = vmatprep.subr.mxu0 0.0
      %795 = vmatpush1.msra.mxu0 0.0
      %796 = vmatprep.subr.mxu0 0.0
      %797 = vmatpush1.msra.mxu0 0.0
      %798 = vmatprep.subr.mxu0 0.0
      %799 = vmatpush1.msra.mxu0 0.0
      %800 = vmatprep.subr.mxu0 0.0
      %801 = vmatpush1.msra.mxu0 0.0
      %802 = vmatprep.subr.mxu0 0.0
      %803 = vmatpush1.msra.mxu0 0.0
      %804 = vmatprep.subr.mxu0 0.0
      %805 = vmatpush1.msra.mxu0 0.0
      %806 = vmatprep.subr.mxu0 0.0
      %807 = vmatpush1.msra.mxu0 0.0
      %808 = vmatprep.subr.mxu0 0.0
      %809 = vmatpush1.msra.mxu0 0.0
      %810 = vmatprep.subr.mxu0 0.0
      %811 = vmatpush1.msra.mxu0 0.0
      %812 = vmatprep.subr.mxu0 0.0
      %813 = vmatpush1.msra.mxu0 0.0
      %814 = vmatprep.subr.mxu0 0.0
      %815 = vmatpush1.msra.mxu0 0.0
      %816 = vmatprep.subr.mxu0 0.0
      %817 = vmatpush1.msra.mxu0 0.0
      %818 = vmatprep.subr.mxu0 0.0
      %819 = vmatpush1.msra.mxu0 0.0
      %820 = vmatprep.subr.mxu0 0.0
      %821 = vmatpush1.msra.mxu0 0.0
      %822 = vmatprep.subr.mxu0 0.0
      %823 = vmatpush1.msra.mxu0 0.0
      %824 = vmatprep.subr.mxu0 0.0
      %825 = vmatpush1.msra.mxu0 0.0
      %826 = vmatprep.mubr.f32.mxu0 0.0
      %827 = vmatmul.mubr.f32.gmra.mrb[0].mxu0 %v689
      %v828 = vpop.f32.mrb[0].mxu0
      %v829 = vadd.f32 0.0, %v828
      %v830 = vpop.f32.mrb[0].mxu0
      %v831 = vadd.f32 0.0, %v830
      %832 = vdwg.mxu0
      %v833 = vadd.f32 %v758, %v760
      %v834 = vadd.f32 %v833, %v829
      %v835 = vadd.f32 %v834, %v831
      %836 = vadd.xlane.f32.xlu0 %v835
      %v837 = vpop.xlane.xlu0 %836
      %v838 = vmul.f32 %v837, 0.001953125
      %v839 = vmul.f32 %v758, %v758
      %v840 = vmul.f32 %v760, %v760
      %v841 = vmul.f32 %v829, %v829
      %v842 = vmul.f32 %v831, %v831
      %v843 = vadd.f32 %v839, %v840
      %v844 = vadd.f32 %v843, %v841
      %v845 = vadd.f32 %v844, %v842
      %846 = vadd.xlane.f32.xlu0 %v845
      %v847 = vpop.xlane.xlu0 %846
      %v848 = vmul.f32 %v847, 0.001953125
      %v849 = vmul.f32 %v838, %v838
      %v850 = vsub.f32 %v848, %v849
      %v851 = vsub.f32 %v758, %v838
      %v852 = vsub.f32 %v760, %v838
      %v853 = vsub.f32 %v829, %v838
      %v854 = vsub.f32 %v831, %v838
      %v855 = vadd.f32 %v850, 1e-05
      %v856 = vrsqrt.pop %v855
      %v857 = vmul.f32 %v851, %v856
      %v858 = vmul.f32 %v852, %v856
      %v859 = vmul.f32 %v853, %v856
      %v860 = vmul.f32 %v854, %v856
      %vm861 = vcmp.ge.f32.partialorder %v857, 0.0
      %vm862 = vcmp.ge.f32.partialorder %v858, 0.0
      %vm863 = vcmp.ge.f32.partialorder %v859, 0.0
      %vm864 = vcmp.ge.f32.partialorder %v860, 0.0
      %v865 = vmul.f32 %v857, 0.1
      %v866 = vmul.f32 %v858, 0.1
      %v867 = vmul.f32 %v859, 0.1
      %v868 = vmul.f32 %v860, 0.1
      %v869 = vsel %vm861, %v857, %v865
      %v870 = vsel %vm862, %v858, %v866
      %v871 = vsel %vm863, %v859, %v867
      %v872 = vsel %vm864, %v860, %v868
      %873 = vst [vmem:[%s197] sm:$0xff] %v869
      %874 = vst [vmem:[%s197 + $0x8] sm:$0xff] %v870
      %875 = vst [vmem:[%s197 + $0x10] sm:$0xff] %v871
      %876 = vst [vmem:[%s197 + $0x18] sm:$0xff] %v872
      %p877 = scmp.lt.s32.totalorder %s15, 1
      %s878 = scalar_select %p877, %s15, 1
      %s879 = smul.addr %s878, 4
      %s880 = smul.addr %s879, 8
      %s881 = scalar_lea.vmem %s4, %s880
      // Predicated region
      $region37: #{vgg_block_3d.1} parent=35 // pred_check
        %p882 = pneg %p122
      $region38: #{vgg_block_3d.1} parent=35 // pred_check_branch
        %884 = sbr.rel (%p882) target = $region40
      $region39: #{vgg_block_3d.1} parent=35 // pred_region
        _
      $region40: #{vgg_block_3d.1} parent=35 // pred_fallthru
        _
    $region36: #{vgg_block_3d.1} parent=5 // pred_fallthru
      _
    %p885 = scmp.le.s32.totalorder 2, %s10
    // Predicated region
    $region41: #{vgg_block_3d.1} parent=5 // pred_check
      %p886 = pneg %p885
    $region42: #{vgg_block_3d.1} parent=5 // pred_check_branch
      %888 = sbr.rel (%p886) target = $region44
    $region43: #{vgg_block_3d.1} parent=5 // pred_region
      %s889 = ssub.s32 %s10, 2
      // Predicated region
      $region45: #{vgg_block_3d.1} parent=43 // pred_check
        %p890 = pneg %p128
      $region46: #{vgg_block_3d.1} parent=43 // pred_check_branch
        %892 = sbr.rel (%p890) target = $region48
      $region47: #{vgg_block_3d.1} parent=43 // pred_region
        %p893 = scmp.lt.s32.totalorder %s16, 1
        %s894 = scalar_select %p893, %s16, 1
        %s895 = smul.addr %s894, 4
        %s896 = smul.addr %s895, 8
        %s897 = scalar_lea.vmem %s4, %s896
      $region48: #{vgg_block_3d.1} parent=43 // pred_fallthru
        _
    $region44: #{vgg_block_3d.1} parent=5 // pred_fallthru
      _
  $region6: #{vgg_block_3d.1} parent=0 // loop_footer
    %s14 = sadd.s32 1, %s10
  $region7: #{vgg_block_3d.1} parent=0 // loop_footer_branch
    %9 = sbr.rel target = $region3
  $region8: #{vgg_block_3d.1} parent=0 // loop_exit
    _

</llo_original>
